<compile_context>
chip_gen: v6e
topology: v6e:2x2x1
jax: 0.10.0
libtpu: 0.0.40
codegen_flags: <defaults>
</compile_context>

<pallas_src>
import functools
from typing import NamedTuple, Optional

import jax
import jax.numpy as jnp
from jax.experimental import pallas as pl
from jax.experimental.pallas import tpu as pltpu


def _round_up(x, m):
    return (x + m - 1) // m * m


def _cdiv(a, b):
    return (a + b - 1) // b


def _tpu_config():
    """Returns (scoped vmem_limit_bytes, tensorcores per chip) for this TPU gen."""
    try:
        kind = jax.devices()[0].device_kind.lower()
    except Exception:
        kind = ""
    if "v7" in kind:
        # v7x: 64 MiB physical VMEM per TensorCore, 2 TensorCores per chip.
        return 56 * 1024 * 1024, 2
    if "v5" in kind or "v6" in kind:
        # v5e / v6e: 128 MiB VMEM, single TensorCore.
        return 96 * 1024 * 1024, 1
    # Unknown / older generation: stay conservative.
    return 48 * 1024 * 1024, 1


class MlpParams(NamedTuple):
    """Weights pre-padded to lane-dense (multiple-of-128) shapes and pre-cast."""
    w1: jax.Array          # (cin_p, h_p)    compute dtype
    b1: jax.Array          # (1, h_p)        f32
    w2: jax.Array          # (h_p, cout_p)   compute dtype
    b2: jax.Array          # (1, cout_p)     f32
    kh: int                # hidden chunk per reduction step (multiple of 128)
    in_features: int
    hidden_features: int
    out_features: int


def prepare_mlp_params(w1, b1, w2, b2, *, compute_dtype=jnp.bfloat16,
                       kh: Optional[int] = None) -> MlpParams:
    """Pad feature dims to multiples of 128 and cast the weights ONCE.

    Also picks the hidden chunk size `kh`: if the double-buffered padded
    weights fit the per-generation VMEM budget, kh == full hidden so the
    reduction axis has a single step and the weights are fetched exactly once.
    """
    cin, hidden = w1.shape
    cout = w2.shape[1]
    cin_p = _round_up(cin, 128)
    cout_p = _round_up(cout, 128)
    itemsize = jnp.dtype(compute_dtype).itemsize

    if kh is None:
        vmem_limit, _ = _tpu_config()
        weight_budget = int(0.6 * vmem_limit)     # weights are double-buffered
        kh = _round_up(hidden, 128)
        while kh > 128 and 2 * (cin_p + cout_p) * kh * itemsize > weight_budget:
            kh = _round_up(kh // 2, 128)
    kh = max(128, _round_up(int(kh), 128))
    h_p = _round_up(hidden, kh)

    # Zero padding keeps the math exact: gelu(0) = 0 and zero weight rows /
    # columns contribute nothing; padded rows / cols are sliced off at the end.
    w1p = jnp.zeros((cin_p, h_p), compute_dtype).at[:cin, :hidden].set(
        w1.astype(compute_dtype))
    b1p = jnp.zeros((1, h_p), jnp.float32).at[:, :hidden].set(
        b1.reshape(1, hidden).astype(jnp.float32))
    w2p = jnp.zeros((h_p, cout_p), compute_dtype).at[:hidden, :cout].set(
        w2.astype(compute_dtype))
    b2p = jnp.zeros((1, cout_p), jnp.float32).at[:, :cout].set(
        b2.reshape(1, cout).astype(jnp.float32))
    return MlpParams(w1p, b1p, w2p, b2p, int(kh), cin, hidden, cout)


def _mlp_kernel(x_ref, w1_ref, b1_ref, w2_ref, b2_ref, o_ref):
    # Grid = (M tiles, hidden chunks); axis 1 (hidden) is the reduction axis.
    # x_ref:  (tm, cin_p)     compute dtype
    # w1_ref: (cin_p, kh)     compute dtype     b1_ref: (1, kh)      f32
    # w2_ref: (kh, cout_p)    compute dtype     b2_ref: (1, cout_p)  f32
    # o_ref:  (tm, cout_p)    f32 -- block index (i, 0) is constant across the
    # reduction axis, so it stays resident in VMEM and doubles as the
    # accumulator (no scratch needed).
    k = pl.program_id(1)

    @pl.when(k == 0)
    def _():
        # Fold the fc2 bias into the accumulator init.
        o_ref[...] = jnp.broadcast_to(b2_ref[...], o_ref.shape).astype(o_ref.dtype)

    # fc1 partial over this hidden chunk (MXU, f32 accumulation).
    h = jnp.dot(x_ref[...], w1_ref[...], preferred_element_type=jnp.float32)
    h = h + b1_ref[...]

    # Exact (erf-based) GELU in f32, matching torch.nn.GELU's default.
    # (erf lowers to a VPU polynomial; kept exact for parity with PyTorch.)
    h = 0.5 * h * (1.0 + jax.lax.erf(h * jnp.float32(0.7071067811865476)))

    # dropout(p=0.0) == identity -> no-op.

    # fc2 partial: accumulate straight into the resident f32 output tile.
    o_ref[...] += jnp.dot(h.astype(w2_ref.dtype), w2_ref[...],
                          preferred_element_type=jnp.float32)


def _select_tm(m, cin_p, cout_p, kh, weight_itemsize, vmem_limit, num_cores,
               tm=None):
    """Pick the M tile: as large as the VMEM budget allows, >=1 tile per core."""
    budget = int(0.9 * vmem_limit)
    m16 = _round_up(max(m, 1), 16)

    # Large default M tile so weight re-streaming is amortised (arithmetic
    # intensity ~ tm FLOP/byte whenever the hidden axis has > 1 step).
    tm_eff = 512 if tm is None else int(tm)
    tm_eff = max(16, _round_up(min(tm_eff, m16), 16))

    # Double-buffered per-step VMEM footprint (weights + biases are M-invariant).
    fixed = 2 * (cin_p + cout_p) * kh * weight_itemsize + 2 * (kh + cout_p) * 4

    def fits(t):
        per_m = 2 * t * cin_p * weight_itemsize + 2 * t * cout_p * 4
        return fixed + per_m <= budget

    while tm_eff > 16 and not fits(tm_eff):
        tm_eff = max(16, _round_up(tm_eff // 2, 16))

    # v7x megacore: make sure the parallel M axis has at least one tile per
    # TensorCore when the batch is large enough (otherwise one core idles).
    while (num_cores > 1 and tm_eff > 16 and m16 >= 16 * num_cores
           and _cdiv(m16, tm_eff) < num_cores):
        tm_eff = max(16, _round_up(tm_eff // 2, 16))

    return tm_eff


@functools.partial(
    jax.jit,
    static_argnames=("tm", "kh", "out_features", "vmem_limit_bytes"))
def _mlp_call(x2d, w1p, b1p, w2p, b2p, *, tm, kh, out_features,
              vmem_limit_bytes):
    m, cin = x2d.shape
    cin_p, h_p = w1p.shape
    cout_p = w2p.shape[1]
    m_p = _round_up(max(m, 1), tm)

    # Per-call activation pad + cast (weights were padded/cast once, up front).
    xp = jnp.zeros((m_p, cin_p), w1p.dtype).at[:m, :cin].set(
        x2d.astype(w1p.dtype))

    grid = (m_p // tm, h_p // kh)

    out = pl.pallas_call(
        _mlp_kernel,
        out_shape=jax.ShapeDtypeStruct((m_p, cout_p), jnp.float32),
        grid_spec=pltpu.PrefetchScalarGridSpec(
            num_scalar_prefetch=0,
            grid=grid,
            in_specs=[
                pl.BlockSpec((tm, cin_p), lambda i, k: (i, 0)),    # x tile
                pl.BlockSpec((cin_p, kh), lambda i, k: (0, k)),    # w1 chunk
                pl.BlockSpec((1, kh), lambda i, k: (0, k)),        # b1 chunk
                pl.BlockSpec((kh, cout_p), lambda i, k: (k, 0)),   # w2 chunk
                pl.BlockSpec((1, cout_p), lambda i, k: (0, 0)),    # b2
            ],
            out_specs=pl.BlockSpec((tm, cout_p), lambda i, k: (i, 0)),
        ),
        compiler_params=pltpu.CompilerParams(
            # M axis shards across TensorCores (v7x megacore); hidden axis is
            # the reduction and must stay "arbitrary".
            dimension_semantics=("parallel", "arbitrary"),
            vmem_limit_bytes=vmem_limit_bytes,
        ),
    )(xp, w1p, b1p, w2p, b2p)

    return out[:m, :out_features]


def mlp_forward(x, params: MlpParams, *, tm=None):
    """x: (..., in_features). Returns (..., out_features) in x.dtype."""
    orig_shape = x.shape
    x2d = x.reshape(-1, params.in_features)
    m = x2d.shape[0]

    vmem_limit, num_cores = _tpu_config()
    cin_p = params.w1.shape[0]
    cout_p = params.w2.shape[1]
    tm_eff = _select_tm(m, cin_p, cout_p, params.kh,
                        params.w1.dtype.itemsize, vmem_limit, num_cores, tm)

    out = _mlp_call(x2d, params.w1, params.b1, params.w2, params.b2,
                    tm=tm_eff, kh=params.kh,
                    out_features=params.out_features,
                    vmem_limit_bytes=vmem_limit)
    return out.astype(x.dtype).reshape(*orig_shape[:-1], params.out_features)


def init_mlp_params(key, in_features, hidden_features, out_features):
    """Deterministic synthetic params (shapes match nn.Linear), stored as (in, out)."""
    k1, k2, k3, k4 = jax.random.split(key, 4)
    scale1 = 1.0 / jnp.sqrt(in_features)
    scale2 = 1.0 / jnp.sqrt(hidden_features)
    w1 = jax.random.uniform(k1, (in_features, hidden_features), jnp.float32,
                            -scale1, scale1)
    b1 = jax.random.uniform(k2, (hidden_features,), jnp.float32, -scale1, scale1)
    w2 = jax.random.uniform(k3, (hidden_features, out_features), jnp.float32,
                            -scale2, scale2)
    b2 = jax.random.uniform(k4, (out_features,), jnp.float32, -scale2, scale2)
    return w1, b1, w2, b2


def _reference(x, w1, b1, w2, b2):
    h = x @ w1 + b1
    h = 0.5 * h * (1.0 + jax.lax.erf(h * 0.7071067811865476))
    return h @ w2 + b2


if __name__ == "__main__":
    key = jax.random.PRNGKey(0)

    # ---- Case 1: small shapes matching the module spec (B=2, N=8, C=32, H=64).
    B, N, C_in, C_hid, C_out = 2, 8, 32, 64, 32
    kx, kp, key = jax.random.split(key, 3)
    x = jax.random.normal(kx, (B, N, C_in), jnp.float32)
    w1, b1, w2, b2 = init_mlp_params(kp, C_in, C_hid, C_out)

    params_bf16 = prepare_mlp_params(w1, b1, w2, b2)       # bf16 MXU operands
    y = jax.block_until_ready(mlp_forward(x, params_bf16))
    y_ref = _reference(x, w1, b1, w2, b2)
    assert y.shape == (B, N, C_out)
    # bf16 MXU operands with f32 accumulation -> loose tolerance vs f32 ref.
    assert jnp.allclose(y, y_ref, atol=3e-2, rtol=3e-2)

    # f32-operand path (tighter parity with the f32 PyTorch reference).
    params_f32 = prepare_mlp_params(w1, b1, w2, b2, compute_dtype=jnp.float32)
    y32 = jax.block_until_ready(mlp_forward(x, params_f32))
    assert jnp.allclose(y32, y_ref, atol=3e-2, rtol=3e-2)

    # ---- Case 2: medium shapes; weights fit VMEM -> single hidden step
    # (weights fetched once for the whole grid), multiple M tiles.
    B2, N2, C2_in, C2_hid, C2_out = 2, 256, 256, 1024, 256
    kx2, kp2, key = jax.random.split(key, 3)
    x2 = jax.random.normal(kx2, (B2, N2, C2_in), jnp.float32)
    p2 = init_mlp_params(kp2, C2_in, C2_hid, C2_out)
    params2 = prepare_mlp_params(*p2)
    y2 = jax.block_until_ready(mlp_forward(x2, params2))
    y2_ref = _reference(x2, *p2)
    assert y2.shape == (B2, N2, C2_out)
    assert jnp.allclose(y2, y2_ref, atol=3e-2, rtol=3e-2)

    # ---- Case 3: force small hidden chunks + small M tile to exercise the
    # multi-step reduction (accumulate-into-o_ref) path.
    params3 = prepare_mlp_params(*p2, kh=256)
    y3 = jax.block_until_ready(mlp_forward(x2, params3, tm=64))
    assert jnp.allclose(y3, y2_ref, atol=3e-2, rtol=3e-2)

    print("KERNEL_OK")
</pallas_src>

<mosaic_0001>
module attributes {stable_mosaic.version = 11 : i64} {
  func.func @_mlp_kernel(%arg0: i32, %arg1: i32, %arg2: memref<16x128xbf16, #tpu.memory_space<vmem>>, %arg3: memref<128x128xbf16, #tpu.memory_space<vmem>>, %arg4: memref<1x128xf32, #tpu.memory_space<vmem>>, %arg5: memref<128x128xbf16, #tpu.memory_space<vmem>>, %arg6: memref<1x128xf32, #tpu.memory_space<vmem>>, %arg7: memref<16x128xf32, #tpu.memory_space<vmem>>) attributes {dimension_semantics = [#tpu.dimension_semantics<parallel>, #tpu.dimension_semantics<arbitrary>], iteration_bounds = array<i64: 1, 1>, scalar_prefetch = 0 : i64, scratch_operands = 0 : i64, tpu.core_type = #tpu.core_type<tc>, window_params = [{transform_indices = @transform_0, window_bounds = array<i64: 16, 128>}, {transform_indices = @transform_1, window_bounds = array<i64: 128, 128>}, {transform_indices = @transform_2, window_bounds = array<i64: 1, 128>}, {transform_indices = @transform_3, window_bounds = array<i64: 128, 128>}, {pipeline_mode = #tpu.pipeline_mode<synchronous>, transform_indices = @transform_4, window_bounds = array<i64: 1, 128>}, {transform_indices = @transform_5, window_bounds = array<i64: 16, 128>}]} {
    %c0_i32 = arith.constant 0 : i32
    %0 = arith.cmpi eq, %arg1, %c0_i32 : i32
    %1 = arith.extui %0 : i1 to i32
    %c0_i32_0 = arith.constant 0 : i32
    %2 = arith.cmpi ne, %1, %c0_i32_0 : i32
    scf.if %2 {
      %c0_16 = arith.constant 0 : index
      %c0_17 = arith.constant 0 : index
      %23 = vector.load %arg6[%c0_16, %c0_17] : memref<1x128xf32, #tpu.memory_space<vmem>>, vector<1x128xf32>
      %24 = vector.shape_cast %23 : vector<1x128xf32> to vector<1x128xf32>
      %25 = vector.broadcast %24 : vector<1x128xf32> to vector<16x128xf32>
      %c0_18 = arith.constant 0 : index
      %c0_19 = arith.constant 0 : index
      %26 = vector.load %arg7[%c0_18, %c0_19] : memref<16x128xf32, #tpu.memory_space<vmem>>, vector<16x128xf32>
      tpu.vector_store %arg7[%c0_18, %c0_19], %25 {strides = array<i32>} : memref<16x128xf32, #tpu.memory_space<vmem>>, vector<16x128xf32>,
    } else {
    }
    %c0 = arith.constant 0 : index
    %c0_1 = arith.constant 0 : index
    %3 = vector.load %arg2[%c0, %c0_1] : memref<16x128xbf16, #tpu.memory_space<vmem>>, vector<16x128xbf16>
    %c0_2 = arith.constant 0 : index
    %c0_3 = arith.constant 0 : index
    %4 = vector.load %arg3[%c0_2, %c0_3] : memref<128x128xbf16, #tpu.memory_space<vmem>>, vector<128x128xbf16>
    %cst = arith.constant dense<0.000000e+00> : vector<16x128xf32>
    %5 = tpu.matmul %3, %4, %cst {dimension_numbers = #tpu.dot_dimension_numbers<[1], [0], [0], [1], [0, 0, 1, 1], [], []>} : vector<16x128xbf16>, vector<128x128xbf16>, vector<16x128xf32> -> vector<16x128xf32>
    %c0_4 = arith.constant 0 : index
    %c0_5 = arith.constant 0 : index
    %6 = vector.load %arg4[%c0_4, %c0_5] : memref<1x128xf32, #tpu.memory_space<vmem>>, vector<1x128xf32>
    %7 = vector.broadcast %6 : vector<1x128xf32> to vector<16x128xf32>
    %8 = arith.addf %5, %7 : vector<16x128xf32>
    %cst_6 = arith.constant 5.000000e-01 : f32
    %9 = vector.broadcast %cst_6 : f32 to vector<16x128xf32>
    %10 = arith.mulf %9, %8 : vector<16x128xf32>
    %cst_7 = arith.constant 0.707106769 : f32
    %11 = vector.broadcast %cst_7 : f32 to vector<16x128xf32>
    %12 = arith.mulf %8, %11 : vector<16x128xf32>
    %13 = math.erf %12 : vector<16x128xf32>
    %cst_8 = arith.constant 1.000000e+00 : f32
    %14 = vector.broadcast %cst_8 : f32 to vector<16x128xf32>
    %15 = arith.addf %14, %13 : vector<16x128xf32>
    %16 = arith.mulf %10, %15 : vector<16x128xf32>
    %c0_9 = arith.constant 0 : index
    %c0_10 = arith.constant 0 : index
    %17 = vector.load %arg7[%c0_9, %c0_10] : memref<16x128xf32, #tpu.memory_space<vmem>>, vector<16x128xf32>
    %18 = arith.truncf %16 : vector<16x128xf32> to vector<16x128xbf16>
    %c0_11 = arith.constant 0 : index
    %c0_12 = arith.constant 0 : index
    %19 = vector.load %arg5[%c0_11, %c0_12] : memref<128x128xbf16, #tpu.memory_space<vmem>>, vector<128x128xbf16>
    %cst_13 = arith.constant dense<0.000000e+00> : vector<16x128xf32>
    %20 = tpu.matmul %18, %19, %cst_13 {dimension_numbers = #tpu.dot_dimension_numbers<[1], [0], [0], [1], [0, 0, 1, 1], [], []>} : vector<16x128xbf16>, vector<128x128xbf16>, vector<16x128xf32> -> vector<16x128xf32>
    %21 = arith.addf %17, %20 : vector<16x128xf32>
    %c0_14 = arith.constant 0 : index
    %c0_15 = arith.constant 0 : index
    %22 = vector.load %arg7[%c0_14, %c0_15] : memref<16x128xf32, #tpu.memory_space<vmem>>, vector<16x128xf32>
    tpu.vector_store %arg7[%c0_14, %c0_15], %21 {strides = array<i32>} : memref<16x128xf32, #tpu.memory_space<vmem>>, vector<16x128xf32>,
    return
  }
  func.func @transform_0(%arg0: i32, %arg1: i32) -> (i32, i32) {
    %c0_i32 = arith.constant 0 : i32
    %c0_i32_0 = arith.constant 0 : i32
    return %arg0, %c0_i32 : i32, i32
  }
  func.func @transform_1(%arg0: i32, %arg1: i32) -> (i32, i32) {
    %c0_i32 = arith.constant 0 : i32
    %c0_i32_0 = arith.constant 0 : i32
    return %c0_i32, %arg1 : i32, i32
  }
  func.func @transform_2(%arg0: i32, %arg1: i32) -> (i32, i32) {
    %c0_i32 = arith.constant 0 : i32
    %c0_i32_0 = arith.constant 0 : i32
    return %c0_i32, %arg1 : i32, i32
  }
  func.func @transform_3(%arg0: i32, %arg1: i32) -> (i32, i32) {
    %c0_i32 = arith.constant 0 : i32
    %c0_i32_0 = arith.constant 0 : i32
    return %arg1, %c0_i32 : i32, i32
  }
  func.func @transform_4(%arg0: i32, %arg1: i32) -> (i32, i32) {
    %c0_i32 = arith.constant 0 : i32
    %c0_i32_0 = arith.constant 0 : i32
    %c0_i32_1 = arith.constant 0 : i32
    return %c0_i32, %c0_i32_0 : i32, i32
  }
  func.func @transform_5(%arg0: i32, %arg1: i32) -> (i32, i32) {
    %c0_i32 = arith.constant 0 : i32
    %c0_i32_0 = arith.constant 0 : i32
    return %arg0, %c0_i32 : i32, i32
  }
}

</mosaic_0001>

<llo_original>
// kernel: _mlp_call.1
$region0: #{_mlp_call.1}
  #allocation0 [shape = 'u32[]', space=smem, size = 0x4, offset = 0x4, fixed_abs, tag = 'smem constant byte address 0x4 - core index']
  #allocation1 [shape = 'u32[144,128]{1,0:T(1,128)}', space=vmem, size = 0x12000, scoped, tag = 'internal scratch']
  %s0 = inlined_call_operand.vmem [shape: bf16[16,128], index: 0, kind: input, shape index: {}]
  %s1 = inlined_call_operand.hbm [shape: bf16[128,128], index: 1, kind: input, shape index: {}]
  %s2 = inlined_call_operand.vmem [shape: f32[1,128], index: 2, kind: input, shape index: {}]
  %s3 = inlined_call_operand.hbm [shape: bf16[128,128], index: 3, kind: input, shape index: {}]
  %s4 = inlined_call_operand.vmem [shape: f32[1,128], index: 4, kind: input, shape index: {}]
  %s5 = inlined_call_operand.hbm [shape: f32[16,128], index: 5, kind: output, shape index: {}]
  %s6 = sld [smem:[#allocation0]]
  $region42: #{_mlp_call.1} parent=0
    _
  %s8 = ssub.s32 1, %s6
  %s9 = scalar_select 0, %s8, %s6
  $region1: #{_mlp_call.1} parent=0
    #allocation2 [shape = 'u8[32768]{0}', space=vmem, size = 0x8000, scoped, tag = 'input window, operand 1, single buffered']
    #allocation3 [shape = 's32[1]{0}', space=sflag, size = 0x4, scoped, tag = 'scoped memory for _mlp_call.1']
    #allocation4 [shape = 's32[1]{0}', space=sflag, size = 0x4, scoped, tag = 'scoped memory for _mlp_call.1']
    #allocation5 [shape = 'u8[32768]{0}', space=vmem, size = 0x8000, scoped, tag = 'input window, operand 3, single buffered']
    #allocation6 [shape = 's32[1]{0}', space=sflag, size = 0x4, scoped, tag = 'scoped memory for _mlp_call.1']
    #allocation7 [shape = 'u8[8192]{0}', space=vmem, size = 0x2000, scoped, tag = 'output window, operand 0, single buffered']
    %10 = vsyncpa [#allocation3], 0
    %11 = vsyncpa [#allocation6], 0
    %12 = vsyncpa [#allocation4], 0
    // Predicated region
    $region2: #{_mlp_call.1} parent=1 // pred_check
      _
    $region3: #{_mlp_call.1} parent=1 // pred_check_branch
      %14 = sbr.rel (0) target = $region5
    $region4: #{_mlp_call.1} parent=1 // pred_region
      _
    $region5: #{_mlp_call.1} parent=1 // pred_fallthru
      _
    // Predicated region
    $region6: #{_mlp_call.1} parent=1 // pred_check
      _
    $region7: #{_mlp_call.1} parent=1 // pred_check_branch
      %16 = sbr.rel (0) target = $region9
    $region8: #{_mlp_call.1} parent=1 // pred_region
      %s18 = ssub.s32 1024, 1024
      %19 = vsyncadd [#allocation3], %s18
      %s20 = sshll.u32 [#allocation2], 4
      %s21 = int_to_ptr.vmem [resolvable:$true] %s20
      %26 = dma.hbm_to_vmem [thread:$0]  %s1, 1024, %s21, [#allocation3], 64, 64, 4
    $region9: #{_mlp_call.1} parent=1 // pred_fallthru
      _
    // Predicated region
    $region10: #{_mlp_call.1} parent=1 // pred_check
      _
    $region11: #{_mlp_call.1} parent=1 // pred_check_branch
      %28 = sbr.rel (0) target = $region13
    $region12: #{_mlp_call.1} parent=1 // pred_region
      _
    $region13: #{_mlp_call.1} parent=1 // pred_fallthru
      _
    // Predicated region
    $region14: #{_mlp_call.1} parent=1 // pred_check
      _
    $region15: #{_mlp_call.1} parent=1 // pred_check_branch
      %30 = sbr.rel (0) target = $region17
    $region16: #{_mlp_call.1} parent=1 // pred_region
      %s32 = ssub.s32 1024, 1024
      %33 = vsyncadd [#allocation6], %s32
      %s34 = sshll.u32 [#allocation5], 4
      %s35 = int_to_ptr.vmem [resolvable:$true] %s34
      %40 = dma.hbm_to_vmem [thread:$0]  %s3, 1024, %s35, [#allocation6], 64, 64, 4
    $region17: #{_mlp_call.1} parent=1 // pred_fallthru
      _
    // Predicated region
    $region18: #{_mlp_call.1} parent=1 // pred_check
      _
    $region19: #{_mlp_call.1} parent=1 // pred_check_branch
      %42 = sbr.rel (0) target = $region21
    $region20: #{_mlp_call.1} parent=1 // pred_region
      _
    $region21: #{_mlp_call.1} parent=1 // pred_fallthru
      _
    // Predicated region
    $region22: #{_mlp_call.1} parent=1 // pred_check
      _
    $region23: #{_mlp_call.1} parent=1 // pred_check_branch
      %44 = sbr.rel (0) target = $region25
    $region24: #{_mlp_call.1} parent=1 // pred_region
      %45 = dma.done [#allocation3], 1024
    $region25: #{_mlp_call.1} parent=1 // pred_fallthru
      _
    // Predicated region
    $region26: #{_mlp_call.1} parent=1 // pred_check
      _
    $region27: #{_mlp_call.1} parent=1 // pred_check_branch
      %47 = sbr.rel (0) target = $region29
    $region28: #{_mlp_call.1} parent=1 // pred_region
      %48 = dma.done [#allocation6], 1024
    $region29: #{_mlp_call.1} parent=1 // pred_fallthru
      _
    %p50 = scmp.eq.s32.totalorder 0, 0
    // Predicated region
    $region30: #{_mlp_call.1} parent=1 // pred_check
      %p51 = pneg %p50
    $region31: #{_mlp_call.1} parent=1 // pred_check_branch
      %53 = sbr.rel (%p51) target = $region33
    $region32: #{_mlp_call.1} parent=1 // pred_region
      %v54 = vld [vmem:[%s4] sm:$0x1]
      %v56 = vlaneseq
      %v57 = vshrl.u32 %v56, 7
      %v58 = vsub.s32 0, %v57
      %v59 = vrot.slane %v54, %v58
      %61 = vst [vmem:[#allocation7] sm:$0xff] %v59
      %62 = vst [vmem:[#allocation7 + $0x8] sm:$0xff] %v59
    $region33: #{_mlp_call.1} parent=1 // pred_fallthru
      _
    %v63 = vld [vmem:[%s0] sm:$0xf]
    %v64 = vld [vmem:[%s0 + $0x4] sm:$0xf]
    %v65 = vld [vmem:[#allocation2] sm:$0xf]
    %v66 = vld [vmem:[#allocation2 + $0x4] sm:$0xf]
    %v67 = vld [vmem:[#allocation2 + $0x8] sm:$0xf]
    %v68 = vld [vmem:[#allocation2 + $0xc] sm:$0xf]
    %v69 = vld [vmem:[#allocation2 + $0x10] sm:$0xf]
    %v70 = vld [vmem:[#allocation2 + $0x14] sm:$0xf]
    %v71 = vld [vmem:[#allocation2 + $0x18] sm:$0xf]
    %v72 = vld [vmem:[#allocation2 + $0x1c] sm:$0xf]
    %v73 = vld [vmem:[#allocation2 + $0x20] sm:$0xf]
    %v74 = vld [vmem:[#allocation2 + $0x24] sm:$0xf]
    %v75 = vld [vmem:[#allocation2 + $0x28] sm:$0xf]
    %v76 = vld [vmem:[#allocation2 + $0x2c] sm:$0xf]
    %v77 = vld [vmem:[#allocation2 + $0x30] sm:$0xf]
    %v78 = vld [vmem:[#allocation2 + $0x34] sm:$0xf]
    %v79 = vld [vmem:[#allocation2 + $0x38] sm:$0xf]
    %v80 = vld [vmem:[#allocation2 + $0x3c] sm:$0xf]
    %v81 = vld [vmem:[%s2] sm:$0x1]
    %v83 = vlaneseq
    %v84 = vshrl.u32 %v83, 7
    %v85 = vsub.s32 0, %v84
    %v86 = vrot.slane %v81, %v85
    %v90 = vunpack.c.l.b16 %v63
    %v91 = vunpack.c.l.b16 %v64
    %v92 = vpack.c.b16 %v91, %v90
    %v110 = vunpack.c.l.b16 %v65
    %v111 = vunpack.c.l.b16 %v66
    %v112 = vunpack.c.l.b16 %v67
    %v113 = vunpack.c.l.b16 %v68
    %v114 = vunpack.c.l.b16 %v69
    %v115 = vunpack.c.l.b16 %v70
    %v116 = vunpack.c.l.b16 %v71
    %v117 = vunpack.c.l.b16 %v72
    %v118 = vunpack.c.l.b16 %v73
    %v119 = vunpack.c.l.b16 %v74
    %v120 = vunpack.c.l.b16 %v75
    %v121 = vunpack.c.l.b16 %v76
    %v122 = vunpack.c.l.b16 %v77
    %v123 = vunpack.c.l.b16 %v78
    %v124 = vunpack.c.l.b16 %v79
    %v125 = vunpack.c.l.b16 %v80
    %v126 = vpack.c.b16 %v111, %v110
    %v127 = vpack.c.b16 %v113, %v112
    %v128 = vpack.c.b16 %v115, %v114
    %v129 = vpack.c.b16 %v117, %v116
    %v130 = vpack.c.b16 %v119, %v118
    %v131 = vpack.c.b16 %v121, %v120
    %v132 = vpack.c.b16 %v123, %v122
    %v133 = vpack.c.b16 %v125, %v124
    %142 = vmatprep.subr.bf16.mxu0 0
    %143 = vmatpush1.bf16.msra.mxu0 %v133
    %144 = vmatprep.subr.bf16.mxu0 0
    %145 = vmatpush1.bf16.msra.mxu0 %v132
    %146 = vmatprep.subr.bf16.mxu0 0
    %147 = vmatpush1.bf16.msra.mxu0 %v131
    %148 = vmatprep.subr.bf16.mxu0 0
    %149 = vmatpush1.bf16.msra.mxu0 %v130
    %150 = vmatprep.subr.bf16.mxu0 0
    %151 = vmatpush1.bf16.msra.mxu0 %v129
    %152 = vmatprep.subr.bf16.mxu0 0
    %153 = vmatpush1.bf16.msra.mxu0 %v128
    %154 = vmatprep.subr.bf16.mxu0 0
    %155 = vmatpush1.bf16.msra.mxu0 %v127
    %156 = vmatprep.subr.bf16.mxu0 0
    %157 = vmatpush1.bf16.msra.mxu0 %v126
    %158 = vmatprep.subr.bf16.mxu0 0
    %159 = vmatpush2.bf16.msra.mxu0 0
    %160 = vmatprep.subr.bf16.mxu0 0
    %161 = vmatpush2.bf16.msra.mxu0 0
    %162 = vmatprep.subr.bf16.mxu0 0
    %163 = vmatpush2.bf16.msra.mxu0 0
    %164 = vmatprep.subr.bf16.mxu0 0
    %165 = vmatpush2.bf16.msra.mxu0 0
    %166 = vmatprep.subr.bf16.mxu0 0
    %167 = vmatpush2.bf16.msra.mxu0 0
    %168 = vmatprep.subr.bf16.mxu0 0
    %169 = vmatpush2.bf16.msra.mxu0 0
    %170 = vmatprep.subr.bf16.mxu0 0
    %171 = vmatpush2.bf16.msra.mxu0 0
    %172 = vmatprep.subr.bf16.mxu0 0
    %173 = vmatpush2.bf16.msra.mxu0 0
    %174 = vmatprep.mubr.bf16.mxu0 0
    %175 = vmatmul.mubr.bf16.gmra.mxu0 %v92
    %v176 = vpop.f32.mrf.mxu0
    %v177 = vadd.f32 %v86, %v176
    %v178 = vpop.f32.mrf.mxu0
    %v179 = vpop.f32.mrf.mxu0
    %v180 = vadd.f32 %v86, %v179
    %v181 = vpop.f32.mrf.mxu0
    %182 = vdwg.mxu0
    %v183 = vmul.f32 %v177, 0.5
    %v184 = vmul.f32 %v180, 0.5
    %v185 = vmul.f32 %v177, 0.70710677
    %v186 = vmul.f32 %v180, 0.70710677
    %v187 = verf.f32.pop %v185
    %v188 = verf.f32.pop %v186
    %v189 = vadd.f32 %v187, 1.0
    %v190 = vadd.f32 %v188, 1.0
    %v191 = vmul.f32 %v183, %v189
    %v192 = vmul.f32 %v184, %v190
    %v193 = vld [vmem:[#allocation7] sm:$0xff]
    %v194 = vld [vmem:[#allocation7 + $0x8] sm:$0xff]
    %v195 = vpack.c.bf16 %v192, %v191
    %v196 = vld [vmem:[#allocation5] sm:$0xf]
    %v197 = vld [vmem:[#allocation5 + $0x4] sm:$0xf]
    %v198 = vld [vmem:[#allocation5 + $0x8] sm:$0xf]
    %v199 = vld [vmem:[#allocation5 + $0xc] sm:$0xf]
    %v200 = vld [vmem:[#allocation5 + $0x10] sm:$0xf]
    %v201 = vld [vmem:[#allocation5 + $0x14] sm:$0xf]
    %v202 = vld [vmem:[#allocation5 + $0x18] sm:$0xf]
    %v203 = vld [vmem:[#allocation5 + $0x1c] sm:$0xf]
    %v204 = vld [vmem:[#allocation5 + $0x20] sm:$0xf]
    %v205 = vld [vmem:[#allocation5 + $0x24] sm:$0xf]
    %v206 = vld [vmem:[#allocation5 + $0x28] sm:$0xf]
    %v207 = vld [vmem:[#allocation5 + $0x2c] sm:$0xf]
    %v208 = vld [vmem:[#allocation5 + $0x30] sm:$0xf]
    %v209 = vld [vmem:[#allocation5 + $0x34] sm:$0xf]
    %v210 = vld [vmem:[#allocation5 + $0x38] sm:$0xf]
    %v211 = vld [vmem:[#allocation5 + $0x3c] sm:$0xf]
    %v228 = vunpack.c.l.b16 %v196
    %v229 = vunpack.c.l.b16 %v197
    %v230 = vunpack.c.l.b16 %v198
    %v231 = vunpack.c.l.b16 %v199
    %v232 = vunpack.c.l.b16 %v200
    %v233 = vunpack.c.l.b16 %v201
    %v234 = vunpack.c.l.b16 %v202
    %v235 = vunpack.c.l.b16 %v203
    %v236 = vunpack.c.l.b16 %v204
    %v237 = vunpack.c.l.b16 %v205
    %v238 = vunpack.c.l.b16 %v206
    %v239 = vunpack.c.l.b16 %v207
    %v240 = vunpack.c.l.b16 %v208
    %v241 = vunpack.c.l.b16 %v209
    %v242 = vunpack.c.l.b16 %v210
    %v243 = vunpack.c.l.b16 %v211
    %v244 = vpack.c.b16 %v229, %v228
    %v245 = vpack.c.b16 %v231, %v230
    %v246 = vpack.c.b16 %v233, %v232
    %v247 = vpack.c.b16 %v235, %v234
    %v248 = vpack.c.b16 %v237, %v236
    %v249 = vpack.c.b16 %v239, %v238
    %v250 = vpack.c.b16 %v241, %v240
    %v251 = vpack.c.b16 %v243, %v242
    %260 = vmatprep.subr.bf16.mxu0 0
    %261 = vmatpush1.bf16.msra.mxu0 %v251
    %262 = vmatprep.subr.bf16.mxu0 0
    %263 = vmatpush1.bf16.msra.mxu0 %v250
    %264 = vmatprep.subr.bf16.mxu0 0
    %265 = vmatpush1.bf16.msra.mxu0 %v249
    %266 = vmatprep.subr.bf16.mxu0 0
    %267 = vmatpush1.bf16.msra.mxu0 %v248
    %268 = vmatprep.subr.bf16.mxu0 0
    %269 = vmatpush1.bf16.msra.mxu0 %v247
    %270 = vmatprep.subr.bf16.mxu0 0
    %271 = vmatpush1.bf16.msra.mxu0 %v246
    %272 = vmatprep.subr.bf16.mxu0 0
    %273 = vmatpush1.bf16.msra.mxu0 %v245
    %274 = vmatprep.subr.bf16.mxu0 0
    %275 = vmatpush1.bf16.msra.mxu0 %v244
    %276 = vmatprep.subr.bf16.mxu0 0
    %277 = vmatpush2.bf16.msra.mxu0 0
    %278 = vmatprep.subr.bf16.mxu0 0
    %279 = vmatpush2.bf16.msra.mxu0 0
    %280 = vmatprep.subr.bf16.mxu0 0
    %281 = vmatpush2.bf16.msra.mxu0 0
    %282 = vmatprep.subr.bf16.mxu0 0
    %283 = vmatpush2.bf16.msra.mxu0 0
    %284 = vmatprep.subr.bf16.mxu0 0
    %285 = vmatpush2.bf16.msra.mxu0 0
    %286 = vmatprep.subr.bf16.mxu0 0
    %287 = vmatpush2.bf16.msra.mxu0 0
    %288 = vmatprep.subr.bf16.mxu0 0
    %289 = vmatpush2.bf16.msra.mxu0 0
    %290 = vmatprep.subr.bf16.mxu0 0
    %291 = vmatpush2.bf16.msra.mxu0 0
    %292 = vmatprep.mubr.bf16.mxu0 0
    %293 = vmatmul.mubr.bf16.gmra.mxu0 %v195
    %v294 = vpop.f32.mrf.mxu0
    %v295 = vadd.f32 0.0, %v294
    %v296 = vpop.f32.mrf.mxu0
    %v297 = vpop.f32.mrf.mxu0
    %v298 = vadd.f32 0.0, %v297
    %v299 = vpop.f32.mrf.mxu0
    %300 = vdwg.mxu0
    %v301 = vadd.f32 %v193, %v295
    %v302 = vadd.f32 %v194, %v298
    %303 = vst [vmem:[#allocation7] sm:$0xff] %v301
    %304 = vst [vmem:[#allocation7 + $0x8] sm:$0xff] %v302
    // Predicated region
    $region34: #{_mlp_call.1} parent=1 // pred_check
      _
    $region35: #{_mlp_call.1} parent=1 // pred_check_branch
      %306 = sbr.rel (0) target = $region37
    $region36: #{_mlp_call.1} parent=1 // pred_region
      %s308 = ssub.s32 256, 256
      %309 = vsyncadd [#allocation4], %s308
      %s310 = sshll.u32 [#allocation7], 4
      %s311 = int_to_ptr.vmem [resolvable:$true] %s310
      %316 = dma.vmem_to_hbm [thread:$0]  %s311, 256, %s5, [#allocation4], 128, 128, 8
    $region37: #{_mlp_call.1} parent=1 // pred_fallthru
      _
    // Predicated region
    $region38: #{_mlp_call.1} parent=1 // pred_check
      _
    $region39: #{_mlp_call.1} parent=1 // pred_check_branch
      %318 = sbr.rel (0) target = $region41
    $region40: #{_mlp_call.1} parent=1 // pred_region
      %319 = dma.done [#allocation4], 256
    $region41: #{_mlp_call.1} parent=1 // pred_fallthru
      _
    %320 = vsyncpa [#allocation3], 1
    %321 = vsyncpa [#allocation6], 1
    %322 = vsyncpa [#allocation4], 1

</llo_original>
